<compile_context>
chip_gen: v5e
topology: v5e:2x2
jax: 0.10.0
libtpu: 0.0.40
codegen_flags: <defaults>
</compile_context>

<pallas_src>
import math
import functools

import jax
import jax.numpy as jnp
from jax.experimental import pallas as pl
from jax.experimental.pallas import tpu as pltpu

# Raised above the 32 MiB scoped default, but kept below v7x's 64 MiB physical
# VMEM so the same setting is safe on v5e / v6e / v7x.
_VMEM_LIMIT_BYTES = 48 * 1024 * 1024


# ----------------------------- in-kernel helpers -----------------------------

def _layer_norm(x, gamma, beta, eps=1e-6):
    # PyTorch nn.LayerNorm: biased variance over last dim, eps inside sqrt.
    mean = jnp.mean(x, axis=-1, keepdims=True)
    var = jnp.mean((x - mean) ** 2, axis=-1, keepdims=True)
    return (x - mean) * jax.lax.rsqrt(var + eps) * gamma + beta


def _gelu(x):
    # tanh-approximate GELU: the tanh transcendental goes to the EUP slot
    # instead of burning ~10 VALU ops/element like an erf polynomial.
    # (nn.GELU() default is exact erf; the tanh form differs by < ~1e-3.)
    c = math.sqrt(2.0 / math.pi)
    return 0.5 * x * (1.0 + jnp.tanh(c * (x + 0.044715 * x * x * x)))


# --------------------------------- kernels -----------------------------------

def _emb_kernel(tok_ref, pos_ref, g_ref, b_ref, out_ref):
    # tok block: (1, S, H); pos: (S, H); gamma/beta: (1, H)
    x = tok_ref[0] + pos_ref[...]
    out_ref[0] = _layer_norm(x, g_ref[...], b_ref[...])
    # dropout: identity (eval semantics)


def _emb_seg_kernel(tok_ref, pos_ref, seg_ref, g_ref, b_ref, out_ref):
    x = tok_ref[0] + pos_ref[...] + seg_ref[0]
    out_ref[0] = _layer_norm(x, g_ref[...], b_ref[...])
    # dropout: identity (eval semantics)


def encoder_stack_kernel(x_ref, bias_ref,
                         wq_ref, bq_ref, wk_ref, bk_ref, wv_ref, bv_ref,
                         wo_ref, bo_ref, ln1_g_ref, ln1_b_ref,
                         w1_ref, b1_ref, w2_ref, b2_ref,
                         ln2_g_ref, ln2_b_ref,
                         out_ref, act_ref, *, head_num):
    l = pl.program_id(1)

    # Layer 0: seed the resident activation with the embedding output.
    @pl.when(l == 0)
    def _():
        act_ref[...] = x_ref[0]

    x = act_ref[...]                     # (S, H)  f32, resident across layers
    bias = bias_ref[0]                   # (1, S)  additive mask (0 / -1e9)
    S, H = x.shape
    hd = H // head_num
    inv_scale = 1.0 / math.sqrt(hd)

    # --- multi-head self-attention (bf16 MXU operands, f32 accumulation) ---
    x_bf = x.astype(jnp.bfloat16)
    q = jnp.dot(x_bf, wq_ref[0], preferred_element_type=jnp.float32) + bq_ref[0]
    k = jnp.dot(x_bf, wk_ref[0], preferred_element_type=jnp.float32) + bk_ref[0]
    v = jnp.dot(x_bf, wv_ref[0], preferred_element_type=jnp.float32) + bv_ref[0]

    q_bf = (q * inv_scale).astype(jnp.bfloat16)   # fold 1/sqrt(hd) into q once
    k_bf = k.astype(jnp.bfloat16)
    v_bf = v.astype(jnp.bfloat16)
    wo = wo_ref[0]                                 # (H, H) bf16

    # Output projection folded into the head loop (avoids concatenate):
    #   ctx @ Wo == sum_h ctx_h @ Wo[h*hd:(h+1)*hd, :]
    attn_out = jnp.zeros((S, H), jnp.float32)
    for h in range(head_num):                      # small static unroll
        lo, hi = h * hd, (h + 1) * hd
        qh, kh, vh = q_bf[:, lo:hi], k_bf[:, lo:hi], v_bf[:, lo:hi]
        # q @ k^T without explicit transpose: contract the hd dims.
        scores = jax.lax.dot_general(
            qh, kh, (((1,), (1,)), ((), ())),
            preferred_element_type=jnp.float32)            # (S, S)
        scores = scores + bias                              # additive mask
        scores = scores - jnp.max(scores, axis=-1, keepdims=True)
        p = jnp.exp(scores)
        p = p * pl.reciprocal(jnp.sum(p, axis=-1, keepdims=True), approx=True)
        # attention dropout: identity (eval semantics)
        ctx_h = jnp.dot(p.astype(jnp.bfloat16), vh,
                        preferred_element_type=jnp.float32)          # (S, hd)
        attn_out = attn_out + jnp.dot(ctx_h.astype(jnp.bfloat16),
                                      wo[lo:hi, :],
                                      preferred_element_type=jnp.float32)
    attn_out = attn_out + bo_ref[0]

    # --- input sublayer connection: x + LN(attn_out) ---
    h1 = x + _layer_norm(attn_out, ln1_g_ref[0], ln1_b_ref[0])

    # --- position-wise feed-forward ---
    ff = jnp.dot(h1.astype(jnp.bfloat16), w1_ref[0],
                 preferred_element_type=jnp.float32) + b1_ref[0]
    ff = _gelu(ff)
    ff = jnp.dot(ff.astype(jnp.bfloat16), w2_ref[0],
                 preferred_element_type=jnp.float32) + b2_ref[0]

    # --- output sublayer connection: h1 + LN(ff) ---
    h2 = h1 + _layer_norm(ff, ln2_g_ref[0], ln2_b_ref[0])

    act_ref[...] = h2                    # carry to next layer (stays in VMEM)
    # final encoder dropout: identity (eval semantics)

    @pl.when(l == pl.num_programs(1) - 1)
    def _():
        out_ref[0] = act_ref[...].astype(out_ref.dtype)


# --------------------------------- wrappers ----------------------------------

_LAYER_PARAM_ORDER = ("wq", "bq", "wk", "bk", "wv", "bv", "wo", "bo",
                      "ln1_g", "ln1_b", "w1", "b1", "w2", "b2",
                      "ln2_g", "ln2_b")


def run_embedding(tok, pos, gamma, beta, seg=None):
    B, S, H = tok.shape
    bsh = pl.BlockSpec((1, S, H), lambda b: (b, 0, 0))

    def const2(arr):
        return pl.BlockSpec(arr.shape, lambda b: (0, 0))

    if seg is None:
        kernel, in_specs = _emb_kernel, [bsh, const2(pos), const2(gamma), const2(beta)]
        args = (tok, pos, gamma, beta)
    else:
        kernel = _emb_seg_kernel
        in_specs = [bsh, const2(pos), bsh, const2(gamma), const2(beta)]
        args = (tok, pos, seg, gamma, beta)

    return pl.pallas_call(
        kernel,
        out_shape=jax.ShapeDtypeStruct((B, S, H), jnp.float32),
        grid=(B,),
        in_specs=in_specs,
        out_specs=bsh,
        compiler_params=pltpu.CompilerParams(
            dimension_semantics=("parallel",),
            vmem_limit_bytes=_VMEM_LIMIT_BYTES),
    )(*args)


def run_encoder_stack(x, bias, params):
    B, S, H = x.shape
    L = params["wq"].shape[0]
    head_num = params["head_num"]

    act_spec = pl.BlockSpec((1, S, H), lambda b, l: (b, 0, 0))
    bias_spec = pl.BlockSpec((1, 1, S), lambda b, l: (b, 0, 0))

    def weight_spec(arr):
        n_rest = arr.ndim - 1
        return pl.BlockSpec((1,) + arr.shape[1:],
                            lambda b, l, n=n_rest: (l,) + (0,) * n)

    weights = [params[name] for name in _LAYER_PARAM_ORDER]
    kernel = functools.partial(encoder_stack_kernel, head_num=head_num)

    return pl.pallas_call(
        kernel,
        out_shape=jax.ShapeDtypeStruct((B, S, H), jnp.float32),
        grid=(B, L),
        in_specs=[act_spec, bias_spec] + [weight_spec(w) for w in weights],
        out_specs=act_spec,
        scratch_shapes=[pltpu.VMEM((S, H), jnp.float32)],
        compiler_params=pltpu.CompilerParams(
            dimension_semantics=("parallel", "arbitrary"),
            vmem_limit_bytes=_VMEM_LIMIT_BYTES),
    )(x, bias, *weights)


def bert_forward(params, seq_ids, segment_info=None):
    """seq_ids: int32 [B, S] token ids; segment_info: optional int32 [B, S]."""
    B, S = seq_ids.shape

    # Glue: embedding table gathers (no clean small-shape in-kernel gather).
    tok = jnp.take(params["tok_emb"], seq_ids, axis=0)          # (B, S, H)
    pos = params["pos_emb"][:S]                                  # (S, H)
    seg = (jnp.take(params["seg_emb"], segment_info, axis=0)
           if segment_info is not None else None)                # (B, S, H) | None

    x = run_embedding(tok, pos, params["emb_ln_g"], params["emb_ln_b"], seg)

    # Additive attention-mask bias: 0 for real tokens, -1e9 for pad (id == 0),
    # broadcast over heads & query positions inside the kernel.
    bias = jnp.where(seq_ids > 0, 0.0, -1e9).astype(jnp.float32)[:, None, :]

    return run_encoder_stack(x, bias, params)


# ------------------------------- initialization -------------------------------

def init_bert_params(key, vocab_size, max_len, hidden_dim, encoder_num,
                     head_num, ff_dim, std=0.02):
    def normal(k, shape, dtype=jnp.float32):
        return (jax.random.normal(k, shape, jnp.float32) * std).astype(dtype)

    keys = jax.random.split(key, 3 + 6 * encoder_num)
    params = {
        "tok_emb": normal(keys[0], (vocab_size, hidden_dim)),
        "pos_emb": normal(keys[1], (max_len, hidden_dim)),
        "seg_emb": normal(keys[2], (3, hidden_dim)),
        "emb_ln_g": jnp.ones((1, hidden_dim), jnp.float32),
        "emb_ln_b": jnp.zeros((1, hidden_dim), jnp.float32),
        "head_num": head_num,
    }

    L, H, FF = encoder_num, hidden_dim, ff_dim
    bf = jnp.bfloat16   # MXU weights in bf16 (f32 accumulation in-kernel)

    def stacked(offset, shape, dtype):
        ks = [keys[3 + 6 * i + offset] for i in range(L)]
        return jnp.stack([normal(k, shape, dtype) for k in ks], axis=0)

    params.update({
        "wq": stacked(0, (H, H), bf), "bq": jnp.zeros((L, 1, H), jnp.float32),
        "wk": stacked(1, (H, H), bf), "bk": jnp.zeros((L, 1, H), jnp.float32),
        "wv": stacked(2, (H, H), bf), "bv": jnp.zeros((L, 1, H), jnp.float32),
        "wo": stacked(3, (H, H), bf), "bo": jnp.zeros((L, 1, H), jnp.float32),
        "ln1_g": jnp.ones((L, 1, H), jnp.float32),
        "ln1_b": jnp.zeros((L, 1, H), jnp.float32),
        "w1": stacked(4, (H, FF), bf), "b1": jnp.zeros((L, 1, FF), jnp.float32),
        "w2": stacked(5, (FF, H), bf), "b2": jnp.zeros((L, 1, H), jnp.float32),
        "ln2_g": jnp.ones((L, 1, H), jnp.float32),
        "ln2_b": jnp.zeros((L, 1, H), jnp.float32),
    })
    return params


# ----------------------------------- main -------------------------------------

if __name__ == "__main__":
    # Small but forward-consistent configuration.  HIDDEN=128 keeps the output
    # last dim lane-dense (multiple of 128) per the perf review.
    VOCAB, MAX_LEN, HIDDEN, LAYERS, HEADS = 100, 64, 128, 2, 4
    FF = 4 * HIDDEN
    B, S = 2, 8

    key = jax.random.PRNGKey(0)
    k_params, k_seq, k_seg = jax.random.split(key, 3)

    params = init_bert_params(k_params, VOCAB, MAX_LEN, HIDDEN, LAYERS, HEADS, FF)

    seq_ids = jax.random.randint(k_seq, (B, S), 0, VOCAB, dtype=jnp.int32)
    segment_info = jax.random.randint(k_seg, (B, S), 0, 3, dtype=jnp.int32)

    out = bert_forward(params, seq_ids, segment_info)
    out = jax.block_until_ready(out)

    assert out.shape == (B, S, HIDDEN)
    assert jnp.all(jnp.isfinite(out))
    print("KERNEL_OK")
</pallas_src>

<mosaic_0001>
module attributes {stable_mosaic.version = 11 : i64} {
  func.func @_emb_seg_kernel(%arg0: i32, %arg1: memref<1x8x128xf32, #tpu.memory_space<vmem>>, %arg2: memref<8x128xf32, #tpu.memory_space<vmem>>, %arg3: memref<1x8x128xf32, #tpu.memory_space<vmem>>, %arg4: memref<1x128xf32, #tpu.memory_space<vmem>>, %arg5: memref<1x128xf32, #tpu.memory_space<vmem>>, %arg6: memref<1x8x128xf32, #tpu.memory_space<vmem>>) attributes {dimension_semantics = [#tpu.dimension_semantics<parallel>], iteration_bounds = array<i64: 2>, scalar_prefetch = 0 : i64, scratch_operands = 0 : i64, tpu.core_type = #tpu.core_type<tc>, window_params = [{transform_indices = @transform_0, window_bounds = array<i64: 1, 8, 128>}, {pipeline_mode = #tpu.pipeline_mode<synchronous>, transform_indices = @transform_1, window_bounds = array<i64: 8, 128>}, {transform_indices = @transform_2, window_bounds = array<i64: 1, 8, 128>}, {pipeline_mode = #tpu.pipeline_mode<synchronous>, transform_indices = @transform_3, window_bounds = array<i64: 1, 128>}, {pipeline_mode = #tpu.pipeline_mode<synchronous>, transform_indices = @transform_4, window_bounds = array<i64: 1, 128>}, {transform_indices = @transform_5, window_bounds = array<i64: 1, 8, 128>}]} {
    %c0 = arith.constant 0 : index
    %c0_0 = arith.constant 0 : index
    %c0_1 = arith.constant 0 : index
    %0 = vector.load %arg1[%c0, %c0_0, %c0_1] : memref<1x8x128xf32, #tpu.memory_space<vmem>>, vector<1x8x128xf32>
    %1 = vector.shape_cast %0 : vector<1x8x128xf32> to vector<8x128xf32>
    %c0_2 = arith.constant 0 : index
    %c0_3 = arith.constant 0 : index
    %2 = vector.load %arg2[%c0_2, %c0_3] : memref<8x128xf32, #tpu.memory_space<vmem>>, vector<8x128xf32>
    %3 = arith.addf %1, %2 : vector<8x128xf32>
    %c0_4 = arith.constant 0 : index
    %c0_5 = arith.constant 0 : index
    %c0_6 = arith.constant 0 : index
    %4 = vector.load %arg3[%c0_4, %c0_5, %c0_6] : memref<1x8x128xf32, #tpu.memory_space<vmem>>, vector<1x8x128xf32>
    %5 = vector.shape_cast %4 : vector<1x8x128xf32> to vector<8x128xf32>
    %6 = arith.addf %3, %5 : vector<8x128xf32>
    %c0_7 = arith.constant 0 : index
    %c0_8 = arith.constant 0 : index
    %7 = vector.load %arg4[%c0_7, %c0_8] : memref<1x128xf32, #tpu.memory_space<vmem>>, vector<1x128xf32>
    %c0_9 = arith.constant 0 : index
    %c0_10 = arith.constant 0 : index
    %8 = vector.load %arg5[%c0_9, %c0_10] : memref<1x128xf32, #tpu.memory_space<vmem>>, vector<1x128xf32>
    %cst = arith.constant dense<0.000000e+00> : vector<8xf32>
    %9 = vector.multi_reduction <add>, %6, %cst [1] : vector<8x128xf32> to vector<8xf32>
    %10 = vector.shape_cast %9 : vector<8xf32> to vector<8x1xf32>
    %cst_11 = arith.constant 1.280000e+02 : f32
    %11 = vector.broadcast %cst_11 : f32 to vector<8x1xf32>
    %12 = arith.divf %10, %11 : vector<8x1xf32>
    %13 = vector.broadcast %12 : vector<8x1xf32> to vector<8x128xf32>
    %14 = arith.subf %6, %13 : vector<8x128xf32>
    %15 = arith.mulf %14, %14 : vector<8x128xf32>
    %cst_12 = arith.constant dense<0.000000e+00> : vector<8xf32>
    %16 = vector.multi_reduction <add>, %15, %cst_12 [1] : vector<8x128xf32> to vector<8xf32>
    %17 = vector.shape_cast %16 : vector<8xf32> to vector<8x1xf32>
    %cst_13 = arith.constant 1.280000e+02 : f32
    %18 = vector.broadcast %cst_13 : f32 to vector<8x1xf32>
    %19 = arith.divf %17, %18 : vector<8x1xf32>
    %20 = vector.broadcast %12 : vector<8x1xf32> to vector<8x128xf32>
    %21 = arith.subf %6, %20 : vector<8x128xf32>
    %cst_14 = arith.constant 9.99999997E-7 : f32
    %22 = vector.broadcast %cst_14 : f32 to vector<8x1xf32>
    %23 = arith.addf %19, %22 : vector<8x1xf32>
    %24 = math.rsqrt %23 : vector<8x1xf32>
    %25 = vector.broadcast %24 : vector<8x1xf32> to vector<8x128xf32>
    %26 = arith.mulf %21, %25 : vector<8x128xf32>
    %27 = vector.broadcast %7 : vector<1x128xf32> to vector<8x128xf32>
    %28 = arith.mulf %26, %27 : vector<8x128xf32>
    %29 = vector.broadcast %8 : vector<1x128xf32> to vector<8x128xf32>
    %30 = arith.addf %28, %29 : vector<8x128xf32>
    %c0_15 = arith.constant 0 : index
    %c0_16 = arith.constant 0 : index
    %c0_17 = arith.constant 0 : index
    %31 = vector.load %arg6[%c0_15, %c0_16, %c0_17] : memref<1x8x128xf32, #tpu.memory_space<vmem>>, vector<1x8x128xf32>
    %32 = vector.shape_cast %31 : vector<1x8x128xf32> to vector<8x128xf32>
    %33 = vector.shape_cast %30 : vector<8x128xf32> to vector<1x8x128xf32>
    tpu.vector_store %arg6[%c0_15, %c0_16, %c0_17], %33 {strides = array<i32>} : memref<1x8x128xf32, #tpu.memory_space<vmem>>, vector<1x8x128xf32>,
    return
  }
  func.func @transform_0(%arg0: i32) -> (i32, i32, i32) {
    %c0_i32 = arith.constant 0 : i32
    %c0_i32_0 = arith.constant 0 : i32
    %c0_i32_1 = arith.constant 0 : i32
    return %arg0, %c0_i32, %c0_i32_0 : i32, i32, i32
  }
  func.func @transform_1(%arg0: i32) -> (i32, i32) {
    %c0_i32 = arith.constant 0 : i32
    %c0_i32_0 = arith.constant 0 : i32
    %c0_i32_1 = arith.constant 0 : i32
    return %c0_i32, %c0_i32_0 : i32, i32
  }
  func.func @transform_2(%arg0: i32) -> (i32, i32, i32) {
    %c0_i32 = arith.constant 0 : i32
    %c0_i32_0 = arith.constant 0 : i32
    %c0_i32_1 = arith.constant 0 : i32
    return %arg0, %c0_i32, %c0_i32_0 : i32, i32, i32
  }
  func.func @transform_3(%arg0: i32) -> (i32, i32) {
    %c0_i32 = arith.constant 0 : i32
    %c0_i32_0 = arith.constant 0 : i32
    %c0_i32_1 = arith.constant 0 : i32
    return %c0_i32, %c0_i32_0 : i32, i32
  }
  func.func @transform_4(%arg0: i32) -> (i32, i32) {
    %c0_i32 = arith.constant 0 : i32
    %c0_i32_0 = arith.constant 0 : i32
    %c0_i32_1 = arith.constant 0 : i32
    return %c0_i32, %c0_i32_0 : i32, i32
  }
  func.func @transform_5(%arg0: i32) -> (i32, i32, i32) {
    %c0_i32 = arith.constant 0 : i32
    %c0_i32_0 = arith.constant 0 : i32
    %c0_i32_1 = arith.constant 0 : i32
    return %arg0, %c0_i32, %c0_i32_0 : i32, i32, i32
  }
}

</mosaic_0001>

<llo_original>
// kernel: tpu_custom_call.1
$region0: #{tpu_custom_call.1}
  #allocation0 [shape = 'u32[]', space=smem, size = 0x4, offset = 0x4, fixed_abs, tag = 'smem constant byte address 0x4 - core index']
  #allocation1 [shape = 'u32[72,128]{1,0:T(1,128)}', space=vmem, size = 0x9000, scoped, tag = 'internal scratch']
  %s0 = inlined_call_operand.hbm [shape: f32[2,8,128], index: 0, kind: input, shape index: {}]
  %s1 = inlined_call_operand.hbm [shape: f32[8,128], index: 1, kind: input, shape index: {}]
  %s2 = inlined_call_operand.hbm [shape: f32[2,8,128], index: 2, kind: input, shape index: {}]
  %s3 = inlined_call_operand.vmem [shape: f32[1,128], index: 3, kind: input, shape index: {}]
  %s4 = inlined_call_operand.vmem [shape: f32[1,128], index: 4, kind: input, shape index: {}]
  %s5 = inlined_call_operand.hbm [shape: f32[2,8,128], index: 5, kind: output, shape index: {}]
  %s6 = sld [smem:[#allocation0]]
  $region65: #{tpu_custom_call.1} parent=0
    _
  %s8 = ssub.s32 1, %s6
  %s9 = scalar_select 0, %s8, %s6
  $region1: #{tpu_custom_call.1} parent=0
    #allocation2 [shape = 'u8[8192]{0}', space=vmem, size = 0x2000, scoped, tag = 'input window, operand 0']
    #allocation3 [shape = 's32[2]{0}', space=sflag, size = 0x8, scoped, tag = 'scoped memory for tpu_custom_call.1']
    #allocation4 [shape = 's32[2]{0}', space=sflag, size = 0x8, scoped, tag = 'scoped memory for tpu_custom_call.1']
    #allocation5 [shape = 'u8[4096]{0}', space=vmem, size = 0x1000, scoped, tag = 'input window, operand 1, single buffered']
    #allocation6 [shape = 's32[1]{0}', space=sflag, size = 0x4, scoped, tag = 'scoped memory for tpu_custom_call.1']
    #allocation7 [shape = 'u8[8192]{0}', space=vmem, size = 0x2000, scoped, tag = 'input window, operand 2']
    #allocation8 [shape = 'u8[8192]{0}', space=vmem, size = 0x2000, scoped, tag = 'output window, operand 0']
    %10 = vsyncpa [#allocation3], 0
    %s11 = scalar_lea.sflag [#allocation3], 1
    %12 = vsyncpa %s11, 0
    %13 = vsyncpa [#allocation6], 0
    %14 = vsyncpa [#allocation4], 0
    %s15 = scalar_lea.sflag [#allocation4], 1
    %16 = vsyncpa %s15, 0
    loop: start=0, step=1, limit=4
    $region2: #{tpu_custom_call.1} parent=1 // loop_pre_header
      _
    $region3: #{tpu_custom_call.1} parent=1 // loop_header
      %s18 = sphi 0, %s22
      %p19 = scmp.ge.s32.totalorder %s18, 4
      %s28 = sphi 0, %s30
      %s31 = sphi 0, %s28
      %s32 = sphi 0, %s31
      %s48 = sphi 0, %s32
      %s52 = sphi 0, %s52
      %s54 = sphi 0, %s52
      %s55 = sphi 0, %s54
      %s69 = sphi 0, %s55
      %s75 = sphi 0, %s77
      %s78 = sphi 0, %s75
      %s79 = sphi 0, %s78
      %s95 = sphi 0, %s79
      %s99 = sphi 0, %s99
      %s101 = sphi 0, %s99
      %s102 = sphi 0, %s101
      %s116 = sphi 0, %s102
      %s120 = sphi 0, %s120
      %s122 = sphi 0, %s120
      %s123 = sphi 0, %s122
      %s137 = sphi 0, %s123
      %s143 = sphi 0, %s145
      %s146 = sphi 0, %s143
      %s147 = sphi 0, %s146
      %s163 = sphi 0, %s147
    $region4: #{tpu_custom_call.1} parent=1 // loop_header_branch
      %21 = sbr.rel (%p19) target = $region8
    $region5: #{tpu_custom_call.1} parent=1 // loop_body
      %s23 = ssub.s32 %s18, 1
      %s24 = ssub.s32 %s18, 2
      %s25 = sadd.s32 %s18, 1
      %s26 = ssub.s32 %s18, %s25
      %p27 = scmp.eq.s32.totalorder %s26, 0
      %s29 = sadd.s32 %s28, 1
      %s30 = scalar_select %p27, %s28, %s29
      %p33 = pneg %p27
      %p34 = scmp.eq.s32.totalorder %s18, 1
      %p35 = por %p33, %p34
      %p36 = scmp.ne.s32.totalorder %s28, %s31
      %p37 = scmp.eq.s32.totalorder %s18, 0
      %p38 = por %p36, %p37
      %p39 = scmp.ne.s32.totalorder %s28, %s31
      %p40 = scmp.eq.s32.totalorder %s23, 1
      %p41 = por %p39, %p40
      %p42 = scmp.ne.s32.totalorder %s31, %s32
      %p43 = scmp.eq.s32.totalorder %s23, 0
      %p44 = por %p42, %p43
      %p45 = scmp.ne.s32.totalorder %s31, %s32
      %p46 = scmp.eq.s32.totalorder %s24, 1
      %p47 = por %p45, %p46
      %p49 = scmp.ne.s32.totalorder %s32, %s48
      %p50 = scmp.eq.s32.totalorder %s24, 0
      %p51 = por %p49, %p50
      %s53 = sadd.s32 %s52, 1
      %p56 = scmp.eq.s32.totalorder %s18, 1
      %p57 = scmp.ne.s32.totalorder %s52, %s54
      %p58 = scmp.eq.s32.totalorder %s18, 0
      %p59 = por %p57, %p58
      %p60 = scmp.ne.s32.totalorder %s52, %s54
      %p61 = scmp.eq.s32.totalorder %s23, 1
      %p62 = por %p60, %p61
      %p63 = scmp.ne.s32.totalorder %s54, %s55
      %p64 = scmp.eq.s32.totalorder %s23, 0
      %p65 = por %p63, %p64
      %p66 = scmp.ne.s32.totalorder %s54, %s55
      %p67 = scmp.eq.s32.totalorder %s24, 1
      %p68 = por %p66, %p67
      %p70 = scmp.ne.s32.totalorder %s55, %s69
      %p71 = scmp.eq.s32.totalorder %s24, 0
      %p72 = por %p70, %p71
      %s73 = ssub.s32 %s18, %s25
      %p74 = scmp.eq.s32.totalorder %s73, 0
      %s76 = sadd.s32 %s75, 1
      %s77 = scalar_select %p74, %s75, %s76
      %p80 = pneg %p74
      %p81 = scmp.eq.s32.totalorder %s18, 1
      %p82 = por %p80, %p81
      %p83 = scmp.ne.s32.totalorder %s75, %s78
      %p84 = scmp.eq.s32.totalorder %s18, 0
      %p85 = por %p83, %p84
      %p86 = scmp.ne.s32.totalorder %s75, %s78
      %p87 = scmp.eq.s32.totalorder %s23, 1
      %p88 = por %p86, %p87
      %p89 = scmp.ne.s32.totalorder %s78, %s79
      %p90 = scmp.eq.s32.totalorder %s23, 0
      %p91 = por %p89, %p90
      %p92 = scmp.ne.s32.totalorder %s78, %s79
      %p93 = scmp.eq.s32.totalorder %s24, 1
      %p94 = por %p92, %p93
      %p96 = scmp.ne.s32.totalorder %s79, %s95
      %p97 = scmp.eq.s32.totalorder %s24, 0
      %p98 = por %p96, %p97
      %s100 = sadd.s32 %s99, 1
      %p103 = scmp.eq.s32.totalorder %s18, 1
      %p104 = scmp.ne.s32.totalorder %s99, %s101
      %p105 = scmp.eq.s32.totalorder %s18, 0
      %p106 = por %p104, %p105
      %p107 = scmp.ne.s32.totalorder %s99, %s101
      %p108 = scmp.eq.s32.totalorder %s23, 1
      %p109 = por %p107, %p108
      %p110 = scmp.ne.s32.totalorder %s101, %s102
      %p111 = scmp.eq.s32.totalorder %s23, 0
      %p112 = por %p110, %p111
      %p113 = scmp.ne.s32.totalorder %s101, %s102
      %p114 = scmp.eq.s32.totalorder %s24, 1
      %p115 = por %p113, %p114
      %p117 = scmp.ne.s32.totalorder %s102, %s116
      %p118 = scmp.eq.s32.totalorder %s24, 0
      %p119 = por %p117, %p118
      %s121 = sadd.s32 %s120, 1
      %p124 = scmp.eq.s32.totalorder %s18, 1
      %p125 = scmp.ne.s32.totalorder %s120, %s122
      %p126 = scmp.eq.s32.totalorder %s18, 0
      %p127 = por %p125, %p126
      %p128 = scmp.ne.s32.totalorder %s120, %s122
      %p129 = scmp.eq.s32.totalorder %s23, 1
      %p130 = por %p128, %p129
      %p131 = scmp.ne.s32.totalorder %s122, %s123
      %p132 = scmp.eq.s32.totalorder %s23, 0
      %p133 = por %p131, %p132
      %p134 = scmp.ne.s32.totalorder %s122, %s123
      %p135 = scmp.eq.s32.totalorder %s24, 1
      %p136 = por %p134, %p135
      %p138 = scmp.ne.s32.totalorder %s123, %s137
      %p139 = scmp.eq.s32.totalorder %s24, 0
      %p140 = por %p138, %p139
      %s141 = ssub.s32 %s18, %s25
      %p142 = scmp.eq.s32.totalorder %s141, 0
      %s144 = sadd.s32 %s143, 1
      %s145 = scalar_select %p142, %s143, %s144
      %p148 = pneg %p142
      %p149 = scmp.eq.s32.totalorder %s18, 1
      %p150 = por %p148, %p149
      %p151 = scmp.ne.s32.totalorder %s143, %s146
      %p152 = scmp.eq.s32.totalorder %s18, 0
      %p153 = por %p151, %p152
      %p154 = scmp.ne.s32.totalorder %s143, %s146
      %p155 = scmp.eq.s32.totalorder %s23, 1
      %p156 = por %p154, %p155
      %p157 = scmp.ne.s32.totalorder %s146, %s147
      %p158 = scmp.eq.s32.totalorder %s23, 0
      %p159 = por %p157, %p158
      %p160 = scmp.ne.s32.totalorder %s146, %s147
      %p161 = scmp.eq.s32.totalorder %s24, 1
      %p162 = por %p160, %p161
      %p164 = scmp.ne.s32.totalorder %s147, %s163
      %p165 = scmp.eq.s32.totalorder %s24, 0
      %p166 = por %p164, %p165
      %p167 = scmp.le.s32.totalorder 1, %s18
      %p168 = scmp.lt.s32.totalorder %s18, 3
      %p169 = pnand %p167, %p168
      %p170 = pneg %p169
      // Predicated region
      $region9: #{tpu_custom_call.1} parent=5 // pred_check
        _
      $region10: #{tpu_custom_call.1} parent=5 // pred_check_branch
        %172 = sbr.rel (%p169) target = $region12
      $region11: #{tpu_custom_call.1} parent=5 // pred_region
        %s173 = ssub.s32 %s18, 1
        // Predicated region
        $region13: #{tpu_custom_call.1} parent=11 // pred_check
          %p174 = pneg %p65
        $region14: #{tpu_custom_call.1} parent=11 // pred_check_branch
          %176 = sbr.rel (%p174) target = $region16
        $region15: #{tpu_custom_call.1} parent=11 // pred_region
          %178 = vsyncadd [#allocation6], 0
          %s180 = sshll.u32 %s1, 4
          %s181 = int_to_ptr.hbm [resolvable:$true] %s180
          %s182 = sshll.u32 [#allocation5], 4
          %s183 = int_to_ptr.vmem [resolvable:$true] %s182
          %185 = dma.hbm_to_vmem [thread:$0]  %s181, 128, %s183, [#allocation6]
        $region16: #{tpu_custom_call.1} parent=11 // pred_fallthru
          _
        // Predicated region
        $region17: #{tpu_custom_call.1} parent=11 // pred_check
          %p186 = pneg %p112
        $region18: #{tpu_custom_call.1} parent=11 // pred_check_branch
          %188 = sbr.rel (%p186) target = $region20
        $region19: #{tpu_custom_call.1} parent=11 // pred_region
          _
        $region20: #{tpu_custom_call.1} parent=11 // pred_fallthru
          _
        // Predicated region
        $region21: #{tpu_custom_call.1} parent=11 // pred_check
          %p189 = pneg %p133
        $region22: #{tpu_custom_call.1} parent=11 // pred_check_branch
          %191 = sbr.rel (%p189) target = $region24
        $region23: #{tpu_custom_call.1} parent=11 // pred_region
          _
        $region24: #{tpu_custom_call.1} parent=11 // pred_fallthru
          _
      $region12: #{tpu_custom_call.1} parent=5 // pred_fallthru
        _
      %p192 = scmp.lt.s32.totalorder %s18, 2
      // Predicated region
      $region25: #{tpu_custom_call.1} parent=5 // pred_check
        %p193 = pneg %p192
      $region26: #{tpu_custom_call.1} parent=5 // pred_check_branch
        %195 = sbr.rel (%p193) target = $region28
      $region27: #{tpu_custom_call.1} parent=5 // pred_region
        // Predicated region
        $region29: #{tpu_custom_call.1} parent=27 // pred_check
          %p196 = pneg %p38
        $region30: #{tpu_custom_call.1} parent=27 // pred_check_branch
          %198 = sbr.rel (%p196) target = $region32
        $region31: #{tpu_custom_call.1} parent=27 // pred_region
          %s199 = sand.u32 %s18, 1
          %s200 = scalar_lea.sflag [#allocation3], %s199
          %s201 = sand.u32 %s28, 1
          %s202 = smul.addr %s201, 8
          %s203 = scalar_lea.vmem [#allocation2], %s202
          %205 = vsyncadd %s200, 0
          %s206 = smul.addr %s18, 8
          %s207 = scalar_lea.hbm %s0, %s206
          %s209 = sshll.u32 %s207, 4
          %s210 = int_to_ptr.hbm [resolvable:$true] %s209
          %s211 = sshll.u32 %s203, 4
          %s212 = int_to_ptr.vmem [resolvable:$true] %s211
          %214 = dma.hbm_to_vmem [thread:$0]  %s210, 128, %s212, %s200
        $region32: #{tpu_custom_call.1} parent=27 // pred_fallthru
          _
        // Predicated region
        $region33: #{tpu_custom_call.1} parent=27 // pred_check
          %p215 = pneg %p85
        $region34: #{tpu_custom_call.1} parent=27 // pred_check_branch
          %217 = sbr.rel (%p215) target = $region36
        $region35: #{tpu_custom_call.1} parent=27 // pred_region
          %s218 = sand.u32 %s18, 1
          %s219 = scalar_lea.sflag [#allocation3], %s218
          %s220 = sand.u32 %s75, 1
          %s221 = smul.addr %s220, 8
          %s222 = scalar_lea.vmem [#allocation7], %s221
          %224 = vsyncadd %s219, 0
          %s225 = smul.addr %s18, 8
          %s226 = scalar_lea.hbm %s2, %s225
          %s228 = sshll.u32 %s226, 4
          %s229 = int_to_ptr.hbm [resolvable:$true] %s228
          %s230 = sshll.u32 %s222, 4
          %s231 = int_to_ptr.vmem [resolvable:$true] %s230
          %233 = dma.hbm_to_vmem [thread:$0]  %s229, 128, %s231, %s219
        $region36: #{tpu_custom_call.1} parent=27 // pred_fallthru
          _
      $region28: #{tpu_custom_call.1} parent=5 // pred_fallthru
        _
      %p234 = scmp.le.s32.totalorder 1, %s18
      %p235 = scmp.lt.s32.totalorder %s18, 3
      %p236 = pnand %p234, %p235
      %p237 = pneg %p236
      // Predicated region
      $region37: #{tpu_custom_call.1} parent=5 // pred_check
        _
      $region38: #{tpu_custom_call.1} parent=5 // pred_check_branch
        %239 = sbr.rel (%p236) target = $region40
      $region39: #{tpu_custom_call.1} parent=5 // pred_region
        %s240 = ssub.s32 %s18, 1
        %s241 = sand.u32 %s23, 1
        %s242 = scalar_lea.sflag [#allocation3], %s241
        %s243 = sand.u32 %s31, 1
        %s244 = smul.addr %s243, 8
        %s245 = scalar_lea.vmem [#allocation2], %s244
        // Predicated region
        $region41: #{tpu_custom_call.1} parent=39 // pred_check
          %p246 = pneg %p44
        $region42: #{tpu_custom_call.1} parent=39 // pred_check_branch
          %248 = sbr.rel (%p246) target = $region44
        $region43: #{tpu_custom_call.1} parent=39 // pred_region
          %250 = dma.done %s242, 128
        $region44: #{tpu_custom_call.1} parent=39 // pred_fallthru
          _
        // Predicated region
        $region45: #{tpu_custom_call.1} parent=39 // pred_check
          %p251 = pneg %p65
        $region46: #{tpu_custom_call.1} parent=39 // pred_check_branch
          %253 = sbr.rel (%p251) target = $region48
        $region47: #{tpu_custom_call.1} parent=39 // pred_region
          %255 = dma.done [#allocation6], 128
        $region48: #{tpu_custom_call.1} parent=39 // pred_fallthru
          _
        %s256 = sand.u32 %s23, 1
        %s257 = scalar_lea.sflag [#allocation3], %s256
        %s258 = sand.u32 %s78, 1
        %s259 = smul.addr %s258, 8
        %s260 = scalar_lea.vmem [#allocation7], %s259
        // Predicated region
        $region49: #{tpu_custom_call.1} parent=39 // pred_check
          %p261 = pneg %p91
        $region50: #{tpu_custom_call.1} parent=39 // pred_check_branch
          %263 = sbr.rel (%p261) target = $region52
        $region51: #{tpu_custom_call.1} parent=39 // pred_region
          %265 = dma.done %s257, 128
        $region52: #{tpu_custom_call.1} parent=39 // pred_fallthru
          _
        %s266 = sand.u32 %s23, 1
        %s267 = scalar_lea.sflag [#allocation3], %s266
        %s268 = sand.u32 %s31, 1
        %s269 = smul.addr %s268, 8
        %s270 = scalar_lea.vmem [#allocation2], %s269
        %p271 = pneg %p44
        %p272 = pneg %p41
        %p273 = pneg %p65
        %p274 = pneg %p62
        %s275 = sand.u32 %s23, 1
        %s276 = scalar_lea.sflag [#allocation3], %s275
        %s277 = sand.u32 %s78, 1
        %s278 = smul.addr %s277, 8
        %s279 = scalar_lea.vmem [#allocation7], %s278
        %p280 = pneg %p91
        %p281 = pneg %p88
        %p282 = pneg %p112
        %p283 = pneg %p109
        %p284 = pneg %p133
        %p285 = pneg %p130
        %p286 = pneg %p159
        %p287 = pneg %p156
        %s288 = sand.u32 %s146, 1
        %s289 = scalar_lea.sflag [#allocation4], %s288
        %s290 = sand.u32 %s146, 1
        %s291 = smul.addr %s290, 8
        %s292 = scalar_lea.vmem [#allocation8], %s291
        %v293 = vld [vmem:[%s245] sm:$0xff]
        %v294 = vld [vmem:[#allocation5] sm:$0xff]
        %v295 = vadd.f32 %v293, %v294
        %v296 = vld [vmem:[%s260] sm:$0xff]
        %v297 = vadd.f32 %v295, %v296
        %v298 = vld [vmem:[%s3] sm:$0x1]
        %v299 = vld [vmem:[%s4] sm:$0x1]
        %300 = vadd.xlane.f32.xlu0 %v297
        %v301 = vpop.xlane.xlu0 %300
        %v302 = vrcp.pop 128.0
        %v303 = vmul.f32 128.0, %v302
        %v304 = vsub.f32 1.0, %v303
        %v305 = vmul.f32 %v302, %v304
        %v306 = vadd.f32 %v302, %v305
        %vm307 = vweird.f32 %v302
        %v308 = vsel %vm307, %v302, %v306
        %v309 = vmul.f32 %v301, %v308
        %v310 = vsub.f32 %v297, %v309
        %v311 = vmul.f32 %v310, %v310
        %312 = vadd.xlane.f32.xlu0 %v311
        %v313 = vpop.xlane.xlu0 %312
        %v314 = vmul.f32 %v313, %v308
        %v315 = vadd.f32 %v314, 1e-06
        %v316 = vrsqrt.pop %v315
        %v317 = vmul.f32 %v316, %v315
        %v318 = vmul.f32 %v317, %v316
        %v319 = vmul.f32 0.5, %v318
        %v320 = vsub.f32 1.5, %v319
        %v321 = vmul.f32 %v316, %v320
        %vm322 = vweird.f32 %v315
        %vm323 = vweird.f32 %v316
        %vm324 = vmor %vm322, %vm323
        %v325 = vsel %vm324, %v316, %v321
        %v326 = vmul.f32 %v310, %v325
        %v328 = vperm.slane %v298, 0
        %v330 = vmul.f32 %v326, %v328
        %v332 = vperm.slane %v299, 0
        %v334 = vadd.f32 %v330, %v332
        %335 = vst [vmem:[%s292] sm:$0xff] %v334
        %s336 = sand.u32 %s146, 1
        %s337 = scalar_lea.sflag [#allocation4], %s336
        %s338 = sand.u32 %s146, 1
        %s339 = smul.addr %s338, 8
        %s340 = scalar_lea.vmem [#allocation8], %s339
        // Predicated region
        $region53: #{tpu_custom_call.1} parent=39 // pred_check
          %p341 = pneg %p156
        $region54: #{tpu_custom_call.1} parent=39 // pred_check_branch
          %343 = sbr.rel (%p341) target = $region56
        $region55: #{tpu_custom_call.1} parent=39 // pred_region
          %345 = vsyncadd %s337, 0
          %s346 = smul.addr %s23, 8
          %s347 = scalar_lea.hbm %s5, %s346
          %s349 = sshll.u32 %s340, 4
          %s350 = int_to_ptr.vmem [resolvable:$true] %s349
          %s351 = sshll.u32 %s347, 4
          %s352 = int_to_ptr.hbm [resolvable:$true] %s351
          %354 = dma.vmem_to_hbm [thread:$0]  %s350, 128, %s352, %s337
        $region56: #{tpu_custom_call.1} parent=39 // pred_fallthru
          _
      $region40: #{tpu_custom_call.1} parent=5 // pred_fallthru
        _
      %p355 = scmp.le.s32.totalorder 2, %s18
      // Predicated region
      $region57: #{tpu_custom_call.1} parent=5 // pred_check
        %p356 = pneg %p355
      $region58: #{tpu_custom_call.1} parent=5 // pred_check_branch
        %358 = sbr.rel (%p356) target = $region60
      $region59: #{tpu_custom_call.1} parent=5 // pred_region
        %s359 = ssub.s32 %s18, 2
        // Predicated region
        $region61: #{tpu_custom_call.1} parent=59 // pred_check
          %p360 = pneg %p162
        $region62: #{tpu_custom_call.1} parent=59 // pred_check_branch
          %362 = sbr.rel (%p360) target = $region64
        $region63: #{tpu_custom_call.1} parent=59 // pred_region
          %s363 = sand.u32 %s147, 1
          %s364 = scalar_lea.sflag [#allocation4], %s363
          %s365 = sand.u32 %s147, 1
          %s366 = smul.addr %s365, 8
          %s367 = scalar_lea.vmem [#allocation8], %s366
          %369 = dma.done %s364, 128
        $region64: #{tpu_custom_call.1} parent=59 // pred_fallthru
          _
      $region60: #{tpu_custom_call.1} parent=5 // pred_fallthru
        _
    $region6: #{tpu_custom_call.1} parent=1 // loop_footer
      %s22 = sadd.s32 1, %s18
    $region7: #{tpu_custom_call.1} parent=1 // loop_footer_branch
      %17 = sbr.rel target = $region3
    $region8: #{tpu_custom_call.1} parent=1 // loop_exit
      _
    %370 = vsyncpa [#allocation3], 1
    %s371 = scalar_lea.sflag [#allocation3], 1
    %372 = vsyncpa %s371, 1
    %373 = vsyncpa [#allocation6], 1
    %374 = vsyncpa [#allocation4], 1
    %s375 = scalar_lea.sflag [#allocation4], 1
    %376 = vsyncpa %s375, 1

</llo_original>
